<compile_context>
chip_gen: v7x
topology: tpu7x:2x2x1
jax: 0.10.0
libtpu: 0.0.40
codegen_flags: <defaults>
</compile_context>

<pallas_src>
import jax
import jax.numpy as jnp
from jax.experimental import pallas as pl
from jax.experimental.pallas import tpu as pltpu


def _round_up(x, m):
    return (x + m - 1) // m * m


def _mode_matmul_kernel(x_ref, w_ref, o_ref):
    # x: (tm, Bp, 2Ip)   w: (tm, 2Ip, 2Op)   ->   o: (tm, Bp, 2Op)
    # Batched (over the mode tile) matmul on the MXU, f32 accumulation.
    o_ref[...] = jax.lax.dot_general(
        x_ref[...], w_ref[...],
        dimension_numbers=(((2,), (1,)), ((0,), (0,))),
        preferred_element_type=jnp.float32,
    )


def _compl_mul2d_pallas(x_modes, w_modes, *, block_modes=8):
    """einsum('bixy,ioxy->boxy') over complex inputs, via a batched MXU matmul.

    x_modes: (B, I, M1, M2) complex64
    w_modes: (I, O, M1, M2) complex64
    returns: (B, O, M1, M2) complex64
    """
    B, I, M1, M2 = x_modes.shape
    O = w_modes.shape[1]
    M = M1 * M2

    xr = jnp.real(x_modes).reshape(B, I, M).astype(jnp.float32)
    xi = jnp.imag(x_modes).reshape(B, I, M).astype(jnp.float32)
    wr = jnp.real(w_modes).reshape(I, O, M).astype(jnp.float32)
    wi = jnp.imag(w_modes).reshape(I, O, M).astype(jnp.float32)

    # Real-packed per-mode matmul operands:
    #   X  (M, B, 2I)  = [xr | xi]
    #   Wp (M, 2I, 2O) = [[wr, wi], [-wi, wr]]
    # so X @ Wp = [xr@wr - xi@wi | xr@wi + xi@wr] = [out_re | out_im].
    X = jnp.transpose(jnp.concatenate([xr, xi], axis=1), (2, 0, 1))  # (M,B,2I)
    w_top = jnp.concatenate([wr, wi], axis=1)     # (I, 2O, M)  (xr rows)
    w_bot = jnp.concatenate([-wi, wr], axis=1)    # (I, 2O, M)  (xi rows)
    Wp = jnp.transpose(jnp.concatenate([w_top, w_bot], axis=0), (2, 0, 1))

    # Pad: channels to lane multiples (128), batch to sublane multiples (8),
    # modes to a multiple of the grid tile.  Zero padding is exact (zero
    # weights / zero inputs contribute nothing; padded outputs are sliced off).
    CI = _round_up(2 * I, 128)
    CO = _round_up(2 * O, 128)
    Bp = _round_up(B, 8)
    Mp = _round_up(M, block_modes)

    X = jnp.pad(X, ((0, Mp - M), (0, Bp - B), (0, CI - 2 * I)))
    Wp = jnp.pad(Wp, ((0, Mp - M), (0, CI - 2 * I), (0, CO - 2 * O)))

    grid = (Mp // block_modes,)
    cost = pl.CostEstimate(
        flops=2 * Mp * Bp * CI * CO,
        transcendentals=0,
        bytes_accessed=4 * (Mp * Bp * CI + Mp * CI * CO + Mp * Bp * CO),
    )

    out = pl.pallas_call(
        _mode_matmul_kernel,
        out_shape=jax.ShapeDtypeStruct((Mp, Bp, CO), jnp.float32),
        grid=grid,
        in_specs=[
            pl.BlockSpec((block_modes, Bp, CI), lambda m: (m, 0, 0)),
            pl.BlockSpec((block_modes, CI, CO), lambda m: (m, 0, 0)),
        ],
        out_specs=pl.BlockSpec((block_modes, Bp, CO), lambda m: (m, 0, 0)),
        compiler_params=pltpu.CompilerParams(
            dimension_semantics=("parallel",),
        ),
        cost_estimate=cost,
    )(X, Wp)

    out = out[:M, :B, :]                                   # (M, B, 2O)
    out_c = (out[:, :, :O] + 1j * out[:, :, O:2 * O]).astype(jnp.complex64)
    return jnp.transpose(out_c, (1, 2, 0)).reshape(B, O, M1, M2)


def spectral_conv2d(x, weights1, weights2, modes1, modes2, *, block_modes=8):
    """Forward pass matching the PyTorch SpectralConv2d module.

    x: (B, Cin, H, W) float32  ->  (B, Cout, H, W) float32
    weights1, weights2: (Cin, Cout, modes1, modes2) complex64
    """
    B, Cin, H, W = x.shape
    Cout = weights1.shape[1]
    Wf = W // 2 + 1

    x_ft = jnp.fft.rfft2(x)  # (B, Cin, H, Wf) complex64
    # TODO(synk): rfft2/irfft2 have no Pallas primitive; they stay as XLA ops.

    # Fuse the two retained-mode blocks (top / bottom rows) along the mode
    # axis so a single pallas_call handles both.
    x_modes = jnp.concatenate(
        [x_ft[:, :, :modes1, :modes2], x_ft[:, :, H - modes1:, :modes2]],
        axis=2).astype(jnp.complex64)                     # (B, Cin, 2*m1, m2)
    w_modes = jnp.concatenate(
        [weights1, weights2], axis=2).astype(jnp.complex64)

    out_modes = _compl_mul2d_pallas(
        x_modes, w_modes, block_modes=block_modes)        # (B, Cout, 2*m1, m2)

    top = out_modes[:, :, :modes1, :]
    bot = out_modes[:, :, modes1:, :]

    if 2 * modes1 <= H:
        # Assemble the spectrum by concatenation (no zero-init + scatter).
        zpad_w = jnp.zeros((B, Cout, modes1, Wf - modes2), jnp.complex64)
        rows_top = jnp.concatenate([top, zpad_w], axis=-1)
        rows_bot = jnp.concatenate([bot, zpad_w], axis=-1)
        mid = jnp.zeros((B, Cout, H - 2 * modes1, Wf), jnp.complex64)
        out_ft = jnp.concatenate([rows_top, mid, rows_bot], axis=2)
    else:
        # Overlapping mode blocks (rare): match torch's overwrite order.
        out_ft = jnp.zeros((B, Cout, H, Wf), jnp.complex64)
        out_ft = out_ft.at[:, :, :modes1, :modes2].set(top)
        out_ft = out_ft.at[:, :, H - modes1:, :modes2].set(bot)

    return jnp.fft.irfft2(out_ft, s=(H, W))


def _reference(x, weights1, weights2, modes1, modes2):
    """Pure-JAX reference (mirrors the torch code) for a correctness check."""
    B, Cin, H, W = x.shape
    Cout = weights1.shape[1]
    Wf = W // 2 + 1
    x_ft = jnp.fft.rfft2(x)
    out_ft = jnp.zeros((B, Cout, H, Wf), dtype=jnp.complex64)
    out_ft = out_ft.at[:, :, :modes1, :modes2].set(
        jnp.einsum('bixy,ioxy->boxy', x_ft[:, :, :modes1, :modes2], weights1))
    out_ft = out_ft.at[:, :, H - modes1:, :modes2].set(
        jnp.einsum('bixy,ioxy->boxy', x_ft[:, :, H - modes1:, :modes2], weights2))
    return jnp.fft.irfft2(out_ft, s=(H, W))


if __name__ == "__main__":
    # Small, module-consistent shapes.
    B, Cin, Cout = 2, 4, 4
    H = W = 16
    modes1 = modes2 = 6  # at most floor(N/2) + 1 = 9

    key = jax.random.PRNGKey(0)
    kx, kw1r, kw1i, kw2r, kw2i = jax.random.split(key, 5)

    x = jax.random.normal(kx, (B, Cin, H, W), dtype=jnp.float32)

    scale = 1.0 / (Cin * Cout)
    # torch.rand(..., dtype=torch.cfloat) -> uniform[0,1) real and imag parts.
    w1 = (scale * (jax.random.uniform(kw1r, (Cin, Cout, modes1, modes2))
                   + 1j * jax.random.uniform(kw1i, (Cin, Cout, modes1, modes2)))
          ).astype(jnp.complex64)
    w2 = (scale * (jax.random.uniform(kw2r, (Cin, Cout, modes1, modes2))
                   + 1j * jax.random.uniform(kw2i, (Cin, Cout, modes1, modes2)))
          ).astype(jnp.complex64)

    fwd = jax.jit(lambda xx, a, b: spectral_conv2d(xx, a, b, modes1, modes2))
    out = jax.block_until_ready(fwd(x, w1, w2))

    ref = jax.block_until_ready(_reference(x, w1, w2, modes1, modes2))
    assert out.shape == (B, Cout, H, W)
    assert jnp.allclose(out, ref, atol=1e-3, rtol=1e-3), (
        float(jnp.max(jnp.abs(out - ref))))

    print("KERNEL_OK")
</pallas_src>

<mosaic_0001>
module attributes {stable_mosaic.version = 11 : i64} {
  func.func @_mode_matmul_kernel(%arg0: i32, %arg1: memref<8x8x128xf32, #tpu.memory_space<vmem>>, %arg2: memref<8x128x128xf32, #tpu.memory_space<vmem>>, %arg3: memref<8x8x128xf32, #tpu.memory_space<vmem>>) attributes {dimension_semantics = [#tpu.dimension_semantics<parallel>], iteration_bounds = array<i64: 9>, scalar_prefetch = 0 : i64, scratch_operands = 0 : i64, tpu.core_type = #tpu.core_type<tc>, window_params = [{transform_indices = @transform_0, window_bounds = array<i64: 8, 8, 128>}, {transform_indices = @transform_1, window_bounds = array<i64: 8, 128, 128>}, {transform_indices = @transform_2, window_bounds = array<i64: 8, 8, 128>}]} {
    %c0 = arith.constant 0 : index
    %c0_0 = arith.constant 0 : index
    %c0_1 = arith.constant 0 : index
    %0 = vector.load %arg1[%c0, %c0_0, %c0_1] : memref<8x8x128xf32, #tpu.memory_space<vmem>>, vector<8x8x128xf32>
    %c0_2 = arith.constant 0 : index
    %c0_3 = arith.constant 0 : index
    %c0_4 = arith.constant 0 : index
    %1 = vector.load %arg2[%c0_2, %c0_3, %c0_4] : memref<8x128x128xf32, #tpu.memory_space<vmem>>, vector<8x128x128xf32>
    %cst = arith.constant dense<0.000000e+00> : vector<8x8x128xf32>
    %2 = tpu.matmul %0, %1, %cst {dimension_numbers = #tpu.dot_dimension_numbers<[2], [1], [1], [2], [0, 0, 0, 1, 1, 2], [0], [0]>} : vector<8x8x128xf32>, vector<8x128x128xf32>, vector<8x8x128xf32> -> vector<8x8x128xf32>
    %c0_5 = arith.constant 0 : index
    %c0_6 = arith.constant 0 : index
    %c0_7 = arith.constant 0 : index
    %3 = vector.load %arg3[%c0_5, %c0_6, %c0_7] : memref<8x8x128xf32, #tpu.memory_space<vmem>>, vector<8x8x128xf32>
    tpu.vector_store %arg3[%c0_5, %c0_6, %c0_7], %2 {strides = array<i32>} : memref<8x8x128xf32, #tpu.memory_space<vmem>>, vector<8x8x128xf32>,
    return
  }
  func.func @transform_0(%arg0: i32) -> (i32, i32, i32) {
    %c0_i32 = arith.constant 0 : i32
    %c0_i32_0 = arith.constant 0 : i32
    %c0_i32_1 = arith.constant 0 : i32
    return %arg0, %c0_i32, %c0_i32_0 : i32, i32, i32
  }
  func.func @transform_1(%arg0: i32) -> (i32, i32, i32) {
    %c0_i32 = arith.constant 0 : i32
    %c0_i32_0 = arith.constant 0 : i32
    %c0_i32_1 = arith.constant 0 : i32
    return %arg0, %c0_i32, %c0_i32_0 : i32, i32, i32
  }
  func.func @transform_2(%arg0: i32) -> (i32, i32, i32) {
    %c0_i32 = arith.constant 0 : i32
    %c0_i32_0 = arith.constant 0 : i32
    %c0_i32_1 = arith.constant 0 : i32
    return %arg0, %c0_i32, %c0_i32_0 : i32, i32, i32
  }
}

</mosaic_0001>

<llo_original>
// kernel: custom-call.1
$region0: #{custom-call.1}
  %s0 = inlined_call_operand.hbm [shape: c64[4,4,6,6], index: 0, kind: input, shape index: {}]
  %s1 = inlined_call_operand.vmem [shape: f32[4,4,6,6], index: 1, kind: output, shape index: {}]
  %s2 = scalar_lea.hbm %s0, 1536
  $region1: #{custom-call.1} parent=0
    #allocation0 [shape = 's32[1]{0}', space=sflag, size = 0x4, scoped, tag = 'scoped memory for custom-call.1']
    %3 = vsyncpa [#allocation0], 0
    %s4 = sshll.u32 %s1, 4
    %s5 = int_to_ptr.vmem [resolvable:$true] %s4
    %7 = dma.hbm_to_vmem [thread:$0]  %s2, 1536, %s5, [#allocation0]
    %8 = dma.done [#allocation0], 1536
    %9 = vsyncpa [#allocation0], 1

// kernel: neg.1
$region0: #{neg.1}
  #allocation0 [shape = 's32[1]{0}', space=sflag, size = 0x4, scoped, tag = 'scoped memory for neg.1']
  %s0 = inlined_call_operand.vmem [shape: f32[4,4,72], index: 0, kind: input, shape index: {}]
  %s1 = inlined_call_operand.vmem [shape: f32[4,4,72], index: 1, kind: output, shape index: {}]
  %v2 = vld [vmem:[%s0] sm:$0xf]
  %3 = xla_tuple %v2
  %4 = xla_tuple %3
  %v5 = vxor.u32 %v2, 2147483648
  %6 = xla_tuple %v5
  %7 = vst [vmem:[%s1] sm:$0xf] %v5
  %s8 = scalar_lea.vmem %s0, 4
  %v9 = vld [vmem:[%s8] sm:$0xf]
  %10 = xla_tuple %v9
  %11 = xla_tuple %10
  %v12 = vxor.u32 %v9, 2147483648
  %13 = xla_tuple %v12
  %s14 = scalar_lea.vmem %s1, 4
  %15 = vst [vmem:[%s14] sm:$0xf] %v12
  %s16 = scalar_lea.vmem %s0, 8
  %v17 = vld [vmem:[%s16] sm:$0xf]
  %18 = xla_tuple %v17
  %19 = xla_tuple %18
  %v20 = vxor.u32 %v17, 2147483648
  %21 = xla_tuple %v20
  %s22 = scalar_lea.vmem %s1, 8
  %23 = vst [vmem:[%s22] sm:$0xf] %v20
  %s24 = scalar_lea.vmem %s0, 12
  %v25 = vld [vmem:[%s24] sm:$0xf]
  %26 = xla_tuple %v25
  %27 = xla_tuple %26
  %v28 = vxor.u32 %v25, 2147483648
  %29 = xla_tuple %v28
  %s30 = scalar_lea.vmem %s1, 12
  %31 = vst [vmem:[%s30] sm:$0xf] %v28

// kernel: custom-call
$region0: #{custom-call}
  %s0 = inlined_call_operand.hbm [shape: c64[4,4,6,6], index: 0, kind: input, shape index: {}]
  %s1 = inlined_call_operand.vmem [shape: f32[4,4,6,6], index: 1, kind: output, shape index: {}]
  $region1: #{custom-call} parent=0
    #allocation0 [shape = 's32[1]{0}', space=sflag, size = 0x4, scoped, tag = 'scoped memory for custom-call']
    %2 = vsyncpa [#allocation0], 0
    %s3 = sshll.u32 %s1, 4
    %s4 = int_to_ptr.vmem [resolvable:$true] %s3
    %6 = dma.hbm_to_vmem [thread:$0]  %s0, 1536, %s4, [#allocation0]
    %7 = dma.done [#allocation0], 1536
    %8 = vsyncpa [#allocation0], 1

// kernel: _lambda_.1
$region0: #{_lambda_.1}
  #allocation0 [shape = 'u32[]', space=smem, size = 0x4, offset = 0x4, fixed_abs, tag = 'smem constant byte address 0x4 - core index']
  #allocation1 [shape = 'u32[144,128]{1,0:T(1,128)}', space=vmem, size = 0x12000, scoped, tag = 'internal scratch']
  %s0 = inlined_call_operand.vmem [shape: f32[72,8,128], index: 0, kind: input, shape index: {}]
  %s1 = inlined_call_operand.vmem [shape: f32[72,128,128], index: 1, kind: input, shape index: {}]
  %s2 = inlined_call_operand.vmem [shape: f32[72,8,128], index: 2, kind: output, shape index: {}]
  %s3 = sld [smem:[#allocation0]]
  $region41: #{_lambda_.1} parent=0
    _
  %s5 = ssub.s32 1, %s3
  %s6 = scalar_select 0, %s5, %s3
  loop: start=0, step=1, limit=11
  $region2: #{_lambda_.1} parent=0 // loop_pre_header
    _
  $region3: #{_lambda_.1} parent=0 // loop_header
    %s8 = sphi 0, %s12
    %p9 = scmp.ge.s32.totalorder %s8, 11
    %s18 = sphi 0, %s20
    %s21 = sphi 0, %s18
    %s22 = sphi 0, %s21
    %s38 = sphi 0, %s22
    %s44 = sphi 0, %s46
    %s47 = sphi 0, %s44
    %s48 = sphi 0, %s47
    %s64 = sphi 0, %s48
    %s70 = sphi 0, %s72
    %s73 = sphi 0, %s70
    %s74 = sphi 0, %s73
    %s90 = sphi 0, %s74
  $region4: #{_lambda_.1} parent=0 // loop_header_branch
    %11 = sbr.rel (%p9) target = $region8
  $region5: #{_lambda_.1} parent=0 // loop_body
    %s13 = ssub.s32 %s8, 1
    %s14 = ssub.s32 %s8, 2
    %s15 = sadd.s32 %s8, 1
    %s16 = ssub.s32 %s8, %s15
    %p17 = scmp.eq.s32.totalorder %s16, 0
    %s19 = sadd.s32 %s18, 1
    %s20 = scalar_select %p17, %s18, %s19
    %p23 = pneg %p17
    %p24 = scmp.eq.s32.totalorder %s8, 8
    %p25 = por %p23, %p24
    %p26 = scmp.ne.s32.totalorder %s18, %s21
    %p27 = scmp.eq.s32.totalorder %s8, 0
    %p28 = por %p26, %p27
    %p29 = scmp.ne.s32.totalorder %s18, %s21
    %p30 = scmp.eq.s32.totalorder %s13, 8
    %p31 = por %p29, %p30
    %p32 = scmp.ne.s32.totalorder %s21, %s22
    %p33 = scmp.eq.s32.totalorder %s13, 0
    %p34 = por %p32, %p33
    %p35 = scmp.ne.s32.totalorder %s21, %s22
    %p36 = scmp.eq.s32.totalorder %s14, 8
    %p37 = por %p35, %p36
    %p39 = scmp.ne.s32.totalorder %s22, %s38
    %p40 = scmp.eq.s32.totalorder %s14, 0
    %p41 = por %p39, %p40
    %s42 = ssub.s32 %s8, %s15
    %p43 = scmp.eq.s32.totalorder %s42, 0
    %s45 = sadd.s32 %s44, 1
    %s46 = scalar_select %p43, %s44, %s45
    %p49 = pneg %p43
    %p50 = scmp.eq.s32.totalorder %s8, 8
    %p51 = por %p49, %p50
    %p52 = scmp.ne.s32.totalorder %s44, %s47
    %p53 = scmp.eq.s32.totalorder %s8, 0
    %p54 = por %p52, %p53
    %p55 = scmp.ne.s32.totalorder %s44, %s47
    %p56 = scmp.eq.s32.totalorder %s13, 8
    %p57 = por %p55, %p56
    %p58 = scmp.ne.s32.totalorder %s47, %s48
    %p59 = scmp.eq.s32.totalorder %s13, 0
    %p60 = por %p58, %p59
    %p61 = scmp.ne.s32.totalorder %s47, %s48
    %p62 = scmp.eq.s32.totalorder %s14, 8
    %p63 = por %p61, %p62
    %p65 = scmp.ne.s32.totalorder %s48, %s64
    %p66 = scmp.eq.s32.totalorder %s14, 0
    %p67 = por %p65, %p66
    %s68 = ssub.s32 %s8, %s15
    %p69 = scmp.eq.s32.totalorder %s68, 0
    %s71 = sadd.s32 %s70, 1
    %s72 = scalar_select %p69, %s70, %s71
    %p75 = pneg %p69
    %p76 = scmp.eq.s32.totalorder %s8, 8
    %p77 = por %p75, %p76
    %p78 = scmp.ne.s32.totalorder %s70, %s73
    %p79 = scmp.eq.s32.totalorder %s8, 0
    %p80 = por %p78, %p79
    %p81 = scmp.ne.s32.totalorder %s70, %s73
    %p82 = scmp.eq.s32.totalorder %s13, 8
    %p83 = por %p81, %p82
    %p84 = scmp.ne.s32.totalorder %s73, %s74
    %p85 = scmp.eq.s32.totalorder %s13, 0
    %p86 = por %p84, %p85
    %p87 = scmp.ne.s32.totalorder %s73, %s74
    %p88 = scmp.eq.s32.totalorder %s14, 8
    %p89 = por %p87, %p88
    %p91 = scmp.ne.s32.totalorder %s74, %s90
    %p92 = scmp.eq.s32.totalorder %s14, 0
    %p93 = por %p91, %p92
    %p94 = scmp.le.s32.totalorder 1, %s8
    %p95 = scmp.lt.s32.totalorder %s8, 10
    %p96 = pnand %p94, %p95
    %p97 = pneg %p96
    // Predicated region
    $region9: #{_lambda_.1} parent=5 // pred_check
      _
    $region10: #{_lambda_.1} parent=5 // pred_check_branch
      %99 = sbr.rel (%p96) target = $region12
    $region11: #{_lambda_.1} parent=5 // pred_region
      %s100 = ssub.s32 %s8, 1
    $region12: #{_lambda_.1} parent=5 // pred_fallthru
      _
    %p101 = scmp.lt.s32.totalorder %s8, 9
    // Predicated region
    $region13: #{_lambda_.1} parent=5 // pred_check
      %p102 = pneg %p101
    $region14: #{_lambda_.1} parent=5 // pred_check_branch
      %104 = sbr.rel (%p102) target = $region16
    $region15: #{_lambda_.1} parent=5 // pred_region
      // Predicated region
      $region17: #{_lambda_.1} parent=15 // pred_check
        %p105 = pneg %p28
      $region18: #{_lambda_.1} parent=15 // pred_check_branch
        %107 = sbr.rel (%p105) target = $region20
      $region19: #{_lambda_.1} parent=15 // pred_region
        %s108 = smul.u32 8, %s8
        %p109 = scmp.lt.s32.totalorder %s108, 71
        %s110 = scalar_select %p109, %s108, 71
        %s111 = smul.addr %s110, 8
        %s112 = scalar_lea.vmem %s0, %s111
        %s113 = smul.u32 8, %s8
      $region20: #{_lambda_.1} parent=15 // pred_fallthru
        _
      // Predicated region
      $region21: #{_lambda_.1} parent=15 // pred_check
        %p114 = pneg %p54
      $region22: #{_lambda_.1} parent=15 // pred_check_branch
        %116 = sbr.rel (%p114) target = $region24
      $region23: #{_lambda_.1} parent=15 // pred_region
        %s117 = smul.u32 8, %s8
        %p118 = scmp.lt.s32.totalorder %s117, 71
        %s119 = scalar_select %p118, %s117, 71
        %s120 = smul.addr %s119, 16
        %s121 = smul.addr %s120, 8
        %s122 = scalar_lea.vmem %s1, %s121
        %s123 = smul.u32 8, %s8
      $region24: #{_lambda_.1} parent=15 // pred_fallthru
        _
    $region16: #{_lambda_.1} parent=5 // pred_fallthru
      _
    %p124 = scmp.le.s32.totalorder 1, %s8
    %p125 = scmp.lt.s32.totalorder %s8, 10
    %p126 = pnand %p124, %p125
    %p127 = pneg %p126
    // Predicated region
    $region25: #{_lambda_.1} parent=5 // pred_check
      _
    $region26: #{_lambda_.1} parent=5 // pred_check_branch
      %129 = sbr.rel (%p126) target = $region28
    $region27: #{_lambda_.1} parent=5 // pred_region
      %s130 = ssub.s32 %s8, 1
      %s131 = smul.u32 8, %s13
      %p132 = scmp.lt.s32.totalorder %s131, 71
      %s133 = scalar_select %p132, %s131, 71
      %s134 = smul.addr %s133, 8
      %s135 = scalar_lea.vmem %s0, %s134
      %p136 = pneg %p34
      %p137 = pneg %p31
      %s138 = smul.u32 8, %s13
      %p139 = scmp.lt.s32.totalorder %s138, 71
      %s140 = scalar_select %p139, %s138, 71
      %s141 = smul.addr %s140, 16
      %s142 = smul.addr %s141, 8
      %s143 = scalar_lea.vmem %s1, %s142
      %p144 = pneg %p60
      %p145 = pneg %p57
      %p146 = pneg %p86
      %p147 = pneg %p83
      %s148 = smul.u32 8, %s13
      %p149 = scmp.lt.s32.totalorder %s148, 71
      %s150 = scalar_select %p149, %s148, 71
      %s151 = smul.addr %s150, 8
      %s152 = scalar_lea.vmem %s2, %s151
      %s153 = smul.u32 8, %s13
      %p154 = scmp.lt.s32.totalorder %s153, 71
      %s155 = scalar_select %p154, %s153, 71
      %s156 = smul.addr %s155, 8
      %s157 = scalar_lea.vmem %s0, %s156
      %s158 = smul.u32 8, %s13
      %s159 = smul.u32 8, %s13
      %p160 = scmp.lt.s32.totalorder %s159, 71
      %s161 = scalar_select %p160, %s159, 71
      %s162 = smul.addr %s161, 16
      %s163 = smul.addr %s162, 8
      %s164 = scalar_lea.vmem %s1, %s163
      %s165 = smul.u32 8, %s13
      %s166 = smul.u32 8, %s13
      %p167 = scmp.lt.s32.totalorder %s166, 71
      %s168 = scalar_select %p167, %s166, 71
      %s169 = smul.addr %s168, 8
      %s170 = scalar_lea.vmem %s2, %s169
      %s171 = smul.u32 8, %s13
      %v172 = vld [vmem:[%s157] sm:$0xff]
      %v173 = vld [vmem:[%s157 + $0x8] sm:$0xff]
      %v174 = vld [vmem:[%s157 + $0x10] sm:$0xff]
      %v175 = vld [vmem:[%s157 + $0x18] sm:$0xff]
      %v176 = vld [vmem:[%s157 + $0x20] sm:$0xff]
      %v177 = vld [vmem:[%s157 + $0x28] sm:$0xff]
      %v178 = vld [vmem:[%s157 + $0x30] sm:$0xff]
      %v179 = vld [vmem:[%s157 + $0x38] sm:$0xff]
      %v180 = vld [vmem:[%s164] sm:$0xff]
      %v181 = vld [vmem:[%s164 + $0x8] sm:$0xff]
      %v182 = vld [vmem:[%s164 + $0x10] sm:$0xff]
      %v183 = vld [vmem:[%s164 + $0x18] sm:$0xff]
      %v184 = vld [vmem:[%s164 + $0x20] sm:$0xff]
      %v185 = vld [vmem:[%s164 + $0x28] sm:$0xff]
      %v186 = vld [vmem:[%s164 + $0x30] sm:$0xff]
      %v187 = vld [vmem:[%s164 + $0x38] sm:$0xff]
      %v188 = vld [vmem:[%s164 + $0x40] sm:$0xff]
      %v189 = vld [vmem:[%s164 + $0x48] sm:$0xff]
      %v190 = vld [vmem:[%s164 + $0x50] sm:$0xff]
      %v191 = vld [vmem:[%s164 + $0x58] sm:$0xff]
      %v192 = vld [vmem:[%s164 + $0x60] sm:$0xff]
      %v193 = vld [vmem:[%s164 + $0x68] sm:$0xff]
      %v194 = vld [vmem:[%s164 + $0x70] sm:$0xff]
      %v195 = vld [vmem:[%s164 + $0x78] sm:$0xff]
      %v196 = vld [vmem:[%s164 + $0x80] sm:$0xff]
      %v197 = vld [vmem:[%s164 + $0x88] sm:$0xff]
      %v198 = vld [vmem:[%s164 + $0x90] sm:$0xff]
      %v199 = vld [vmem:[%s164 + $0x98] sm:$0xff]
      %v200 = vld [vmem:[%s164 + $0xa0] sm:$0xff]
      %v201 = vld [vmem:[%s164 + $0xa8] sm:$0xff]
      %v202 = vld [vmem:[%s164 + $0xb0] sm:$0xff]
      %v203 = vld [vmem:[%s164 + $0xb8] sm:$0xff]
      %v204 = vld [vmem:[%s164 + $0xc0] sm:$0xff]
      %v205 = vld [vmem:[%s164 + $0xc8] sm:$0xff]
      %v206 = vld [vmem:[%s164 + $0xd0] sm:$0xff]
      %v207 = vld [vmem:[%s164 + $0xd8] sm:$0xff]
      %v208 = vld [vmem:[%s164 + $0xe0] sm:$0xff]
      %v209 = vld [vmem:[%s164 + $0xe8] sm:$0xff]
      %v210 = vld [vmem:[%s164 + $0xf0] sm:$0xff]
      %v211 = vld [vmem:[%s164 + $0xf8] sm:$0xff]
      %v212 = vld [vmem:[%s164 + $0x100] sm:$0xff]
      %v213 = vld [vmem:[%s164 + $0x108] sm:$0xff]
      %v214 = vld [vmem:[%s164 + $0x110] sm:$0xff]
      %v215 = vld [vmem:[%s164 + $0x118] sm:$0xff]
      %v216 = vld [vmem:[%s164 + $0x120] sm:$0xff]
      %v217 = vld [vmem:[%s164 + $0x128] sm:$0xff]
      %v218 = vld [vmem:[%s164 + $0x130] sm:$0xff]
      %v219 = vld [vmem:[%s164 + $0x138] sm:$0xff]
      %v220 = vld [vmem:[%s164 + $0x140] sm:$0xff]
      %v221 = vld [vmem:[%s164 + $0x148] sm:$0xff]
      %v222 = vld [vmem:[%s164 + $0x150] sm:$0xff]
      %v223 = vld [vmem:[%s164 + $0x158] sm:$0xff]
      %v224 = vld [vmem:[%s164 + $0x160] sm:$0xff]
      %v225 = vld [vmem:[%s164 + $0x168] sm:$0xff]
      %v226 = vld [vmem:[%s164 + $0x170] sm:$0xff]
      %v227 = vld [vmem:[%s164 + $0x178] sm:$0xff]
      %v228 = vld [vmem:[%s164 + $0x180] sm:$0xff]
      %v229 = vld [vmem:[%s164 + $0x188] sm:$0xff]
      %v230 = vld [vmem:[%s164 + $0x190] sm:$0xff]
      %v231 = vld [vmem:[%s164 + $0x198] sm:$0xff]
      %v232 = vld [vmem:[%s164 + $0x1a0] sm:$0xff]
      %v233 = vld [vmem:[%s164 + $0x1a8] sm:$0xff]
      %v234 = vld [vmem:[%s164 + $0x1b0] sm:$0xff]
      %v235 = vld [vmem:[%s164 + $0x1b8] sm:$0xff]
      %v236 = vld [vmem:[%s164 + $0x1c0] sm:$0xff]
      %v237 = vld [vmem:[%s164 + $0x1c8] sm:$0xff]
      %v238 = vld [vmem:[%s164 + $0x1d0] sm:$0xff]
      %v239 = vld [vmem:[%s164 + $0x1d8] sm:$0xff]
      %v240 = vld [vmem:[%s164 + $0x1e0] sm:$0xff]
      %v241 = vld [vmem:[%s164 + $0x1e8] sm:$0xff]
      %v242 = vld [vmem:[%s164 + $0x1f0] sm:$0xff]
      %v243 = vld [vmem:[%s164 + $0x1f8] sm:$0xff]
      %v244 = vld [vmem:[%s164 + $0x200] sm:$0xff]
      %v245 = vld [vmem:[%s164 + $0x208] sm:$0xff]
      %v246 = vld [vmem:[%s164 + $0x210] sm:$0xff]
      %v247 = vld [vmem:[%s164 + $0x218] sm:$0xff]
      %v248 = vld [vmem:[%s164 + $0x220] sm:$0xff]
      %v249 = vld [vmem:[%s164 + $0x228] sm:$0xff]
      %v250 = vld [vmem:[%s164 + $0x230] sm:$0xff]
      %v251 = vld [vmem:[%s164 + $0x238] sm:$0xff]
      %v252 = vld [vmem:[%s164 + $0x240] sm:$0xff]
      %v253 = vld [vmem:[%s164 + $0x248] sm:$0xff]
      %v254 = vld [vmem:[%s164 + $0x250] sm:$0xff]
      %v255 = vld [vmem:[%s164 + $0x258] sm:$0xff]
      %v256 = vld [vmem:[%s164 + $0x260] sm:$0xff]
      %v257 = vld [vmem:[%s164 + $0x268] sm:$0xff]
      %v258 = vld [vmem:[%s164 + $0x270] sm:$0xff]
      %v259 = vld [vmem:[%s164 + $0x278] sm:$0xff]
      %v260 = vld [vmem:[%s164 + $0x280] sm:$0xff]
      %v261 = vld [vmem:[%s164 + $0x288] sm:$0xff]
      %v262 = vld [vmem:[%s164 + $0x290] sm:$0xff]
      %v263 = vld [vmem:[%s164 + $0x298] sm:$0xff]
      %v264 = vld [vmem:[%s164 + $0x2a0] sm:$0xff]
      %v265 = vld [vmem:[%s164 + $0x2a8] sm:$0xff]
      %v266 = vld [vmem:[%s164 + $0x2b0] sm:$0xff]
      %v267 = vld [vmem:[%s164 + $0x2b8] sm:$0xff]
      %v268 = vld [vmem:[%s164 + $0x2c0] sm:$0xff]
      %v269 = vld [vmem:[%s164 + $0x2c8] sm:$0xff]
      %v270 = vld [vmem:[%s164 + $0x2d0] sm:$0xff]
      %v271 = vld [vmem:[%s164 + $0x2d8] sm:$0xff]
      %v272 = vld [vmem:[%s164 + $0x2e0] sm:$0xff]
      %v273 = vld [vmem:[%s164 + $0x2e8] sm:$0xff]
      %v274 = vld [vmem:[%s164 + $0x2f0] sm:$0xff]
      %v275 = vld [vmem:[%s164 + $0x2f8] sm:$0xff]
      %v276 = vld [vmem:[%s164 + $0x300] sm:$0xff]
      %v277 = vld [vmem:[%s164 + $0x308] sm:$0xff]
      %v278 = vld [vmem:[%s164 + $0x310] sm:$0xff]
      %v279 = vld [vmem:[%s164 + $0x318] sm:$0xff]
      %v280 = vld [vmem:[%s164 + $0x320] sm:$0xff]
      %v281 = vld [vmem:[%s164 + $0x328] sm:$0xff]
      %v282 = vld [vmem:[%s164 + $0x330] sm:$0xff]
      %v283 = vld [vmem:[%s164 + $0x338] sm:$0xff]
      %v284 = vld [vmem:[%s164 + $0x340] sm:$0xff]
      %v285 = vld [vmem:[%s164 + $0x348] sm:$0xff]
      %v286 = vld [vmem:[%s164 + $0x350] sm:$0xff]
      %v287 = vld [vmem:[%s164 + $0x358] sm:$0xff]
      %v288 = vld [vmem:[%s164 + $0x360] sm:$0xff]
      %v289 = vld [vmem:[%s164 + $0x368] sm:$0xff]
      %v290 = vld [vmem:[%s164 + $0x370] sm:$0xff]
      %v291 = vld [vmem:[%s164 + $0x378] sm:$0xff]
      %v292 = vld [vmem:[%s164 + $0x380] sm:$0xff]
      %v293 = vld [vmem:[%s164 + $0x388] sm:$0xff]
      %v294 = vld [vmem:[%s164 + $0x390] sm:$0xff]
      %v295 = vld [vmem:[%s164 + $0x398] sm:$0xff]
      %v296 = vld [vmem:[%s164 + $0x3a0] sm:$0xff]
      %v297 = vld [vmem:[%s164 + $0x3a8] sm:$0xff]
      %v298 = vld [vmem:[%s164 + $0x3b0] sm:$0xff]
      %v299 = vld [vmem:[%s164 + $0x3b8] sm:$0xff]
      %v300 = vld [vmem:[%s164 + $0x3c0] sm:$0xff]
      %v301 = vld [vmem:[%s164 + $0x3c8] sm:$0xff]
      %v302 = vld [vmem:[%s164 + $0x3d0] sm:$0xff]
      %v303 = vld [vmem:[%s164 + $0x3d8] sm:$0xff]
      %v304 = vld [vmem:[%s164 + $0x3e0] sm:$0xff]
      %v305 = vld [vmem:[%s164 + $0x3e8] sm:$0xff]
      %v306 = vld [vmem:[%s164 + $0x3f0] sm:$0xff]
      %v307 = vld [vmem:[%s164 + $0x3f8] sm:$0xff]
      %308 = vmatprep.subr.mxu0 0.0
      %309 = vmatpush1.msra.mxu0 %v180
      %310 = vmatprep.subr.mxu0 0.0
      %311 = vmatpush1.msra.mxu0 %v181
      %312 = vmatprep.subr.mxu0 0.0
      %313 = vmatpush1.msra.mxu0 %v182
      %314 = vmatprep.subr.mxu0 0.0
      %315 = vmatpush1.msra.mxu0 %v183
      %316 = vmatprep.subr.mxu0 0.0
      %317 = vmatpush1.msra.mxu0 %v184
      %318 = vmatprep.subr.mxu0 0.0
      %319 = vmatpush1.msra.mxu0 %v185
      %320 = vmatprep.subr.mxu0 0.0
      %321 = vmatpush1.msra.mxu0 %v186
      %322 = vmatprep.subr.mxu0 0.0
      %323 = vmatpush1.msra.mxu0 %v187
      %324 = vmatprep.subr.mxu0 0.0
      %325 = vmatpush1.msra.mxu0 %v188
      %326 = vmatprep.subr.mxu0 0.0
      %327 = vmatpush1.msra.mxu0 %v189
      %328 = vmatprep.subr.mxu0 0.0
      %329 = vmatpush1.msra.mxu0 %v190
      %330 = vmatprep.subr.mxu0 0.0
      %331 = vmatpush1.msra.mxu0 %v191
      %332 = vmatprep.subr.mxu0 0.0
      %333 = vmatpush1.msra.mxu0 %v192
      %334 = vmatprep.subr.mxu0 0.0
      %335 = vmatpush1.msra.mxu0 %v193
      %336 = vmatprep.subr.mxu0 0.0
      %337 = vmatpush1.msra.mxu0 %v194
      %338 = vmatprep.subr.mxu0 0.0
      %339 = vmatpush1.msra.mxu0 %v195
      %340 = vmatprep.subr.mxu0 0.0
      %341 = vmatpush1.msra.mxu0 0.0
      %342 = vmatprep.subr.mxu0 0.0
      %343 = vmatpush1.msra.mxu0 0.0
      %344 = vmatprep.subr.mxu0 0.0
      %345 = vmatpush1.msra.mxu0 0.0
      %346 = vmatprep.subr.mxu0 0.0
      %347 = vmatpush1.msra.mxu0 0.0
      %348 = vmatprep.subr.mxu0 0.0
      %349 = vmatpush1.msra.mxu0 0.0
      %350 = vmatprep.subr.mxu0 0.0
      %351 = vmatpush1.msra.mxu0 0.0
      %352 = vmatprep.subr.mxu0 0.0
      %353 = vmatpush1.msra.mxu0 0.0
      %354 = vmatprep.subr.mxu0 0.0
      %355 = vmatpush1.msra.mxu0 0.0
      %356 = vmatprep.subr.mxu0 0.0
      %357 = vmatpush1.msra.mxu0 0.0
      %358 = vmatprep.subr.mxu0 0.0
      %359 = vmatpush1.msra.mxu0 0.0
      %360 = vmatprep.subr.mxu0 0.0
      %361 = vmatpush1.msra.mxu0 0.0
      %362 = vmatprep.subr.mxu0 0.0
      %363 = vmatpush1.msra.mxu0 0.0
      %364 = vmatprep.subr.mxu0 0.0
      %365 = vmatpush1.msra.mxu0 0.0
      %366 = vmatprep.subr.mxu0 0.0
      %367 = vmatpush1.msra.mxu0 0.0
      %368 = vmatprep.subr.mxu0 0.0
      %369 = vmatpush1.msra.mxu0 0.0
      %370 = vmatprep.subr.mxu0 0.0
      %371 = vmatpush1.msra.mxu0 0.0
      %372 = vmatprep.mubr.f32.mxu0 0.0
      %373 = vmatmul.mubr.f32.gmra.mrb[0].mxu0 %v172
      %v374 = vpop.f32.mrb[0].mxu0
      %v375 = vadd.f32 0.0, %v374
      %v376 = vpop.f32.mrb[0].mxu0
      %377 = vdwg.mxu0
      %378 = vmatprep.subr.mxu0 0.0
      %379 = vmatpush1.msra.mxu0 %v196
      %380 = vmatprep.subr.mxu0 0.0
      %381 = vmatpush1.msra.mxu0 %v197
      %382 = vmatprep.subr.mxu0 0.0
      %383 = vmatpush1.msra.mxu0 %v198
      %384 = vmatprep.subr.mxu0 0.0
      %385 = vmatpush1.msra.mxu0 %v199
      %386 = vmatprep.subr.mxu0 0.0
      %387 = vmatpush1.msra.mxu0 %v200
      %388 = vmatprep.subr.mxu0 0.0
      %389 = vmatpush1.msra.mxu0 %v201
      %390 = vmatprep.subr.mxu0 0.0
      %391 = vmatpush1.msra.mxu0 %v202
      %392 = vmatprep.subr.mxu0 0.0
      %393 = vmatpush1.msra.mxu0 %v203
      %394 = vmatprep.subr.mxu0 0.0
      %395 = vmatpush1.msra.mxu0 %v204
      %396 = vmatprep.subr.mxu0 0.0
      %397 = vmatpush1.msra.mxu0 %v205
      %398 = vmatprep.subr.mxu0 0.0
      %399 = vmatpush1.msra.mxu0 %v206
      %400 = vmatprep.subr.mxu0 0.0
      %401 = vmatpush1.msra.mxu0 %v207
      %402 = vmatprep.subr.mxu0 0.0
      %403 = vmatpush1.msra.mxu0 %v208
      %404 = vmatprep.subr.mxu0 0.0
      %405 = vmatpush1.msra.mxu0 %v209
      %406 = vmatprep.subr.mxu0 0.0
      %407 = vmatpush1.msra.mxu0 %v210
      %408 = vmatprep.subr.mxu0 0.0
      %409 = vmatpush1.msra.mxu0 %v211
      %410 = vmatprep.subr.mxu0 0.0
      %411 = vmatpush1.msra.mxu0 0.0
      %412 = vmatprep.subr.mxu0 0.0
      %413 = vmatpush1.msra.mxu0 0.0
      %414 = vmatprep.subr.mxu0 0.0
      %415 = vmatpush1.msra.mxu0 0.0
      %416 = vmatprep.subr.mxu0 0.0
      %417 = vmatpush1.msra.mxu0 0.0
      %418 = vmatprep.subr.mxu0 0.0
      %419 = vmatpush1.msra.mxu0 0.0
      %420 = vmatprep.subr.mxu0 0.0
      %421 = vmatpush1.msra.mxu0 0.0
      %422 = vmatprep.subr.mxu0 0.0
      %423 = vmatpush1.msra.mxu0 0.0
      %424 = vmatprep.subr.mxu0 0.0
      %425 = vmatpush1.msra.mxu0 0.0
      %426 = vmatprep.subr.mxu0 0.0
      %427 = vmatpush1.msra.mxu0 0.0
      %428 = vmatprep.subr.mxu0 0.0
      %429 = vmatpush1.msra.mxu0 0.0
      %430 = vmatprep.subr.mxu0 0.0
      %431 = vmatpush1.msra.mxu0 0.0
      %432 = vmatprep.subr.mxu0 0.0
      %433 = vmatpush1.msra.mxu0 0.0
      %434 = vmatprep.subr.mxu0 0.0
      %435 = vmatpush1.msra.mxu0 0.0
      %436 = vmatprep.subr.mxu0 0.0
      %437 = vmatpush1.msra.mxu0 0.0
      %438 = vmatprep.subr.mxu0 0.0
      %439 = vmatpush1.msra.mxu0 0.0
      %440 = vmatprep.subr.mxu0 0.0
      %441 = vmatpush1.msra.mxu0 0.0
      %442 = vmatprep.mubr.f32.mxu0 0.0
      %443 = vmatmul.mubr.f32.gmra.mrb[0].mxu0 %v173
      %v444 = vpop.f32.mrb[0].mxu0
      %v445 = vadd.f32 0.0, %v444
      %v446 = vpop.f32.mrb[0].mxu0
      %447 = vdwg.mxu0
      %448 = vmatprep.subr.mxu0 0.0
      %449 = vmatpush1.msra.mxu0 %v212
      %450 = vmatprep.subr.mxu0 0.0
      %451 = vmatpush1.msra.mxu0 %v213
      %452 = vmatprep.subr.mxu0 0.0
      %453 = vmatpush1.msra.mxu0 %v214
      %454 = vmatprep.subr.mxu0 0.0
      %455 = vmatpush1.msra.mxu0 %v215
      %456 = vmatprep.subr.mxu0 0.0
      %457 = vmatpush1.msra.mxu0 %v216
      %458 = vmatprep.subr.mxu0 0.0
      %459 = vmatpush1.msra.mxu0 %v217
      %460 = vmatprep.subr.mxu0 0.0
      %461 = vmatpush1.msra.mxu0 %v218
      %462 = vmatprep.subr.mxu0 0.0
      %463 = vmatpush1.msra.mxu0 %v219
      %464 = vmatprep.subr.mxu0 0.0
      %465 = vmatpush1.msra.mxu0 %v220
      %466 = vmatprep.subr.mxu0 0.0
      %467 = vmatpush1.msra.mxu0 %v221
      %468 = vmatprep.subr.mxu0 0.0
      %469 = vmatpush1.msra.mxu0 %v222
      %470 = vmatprep.subr.mxu0 0.0
      %471 = vmatpush1.msra.mxu0 %v223
      %472 = vmatprep.subr.mxu0 0.0
      %473 = vmatpush1.msra.mxu0 %v224
      %474 = vmatprep.subr.mxu0 0.0
      %475 = vmatpush1.msra.mxu0 %v225
      %476 = vmatprep.subr.mxu0 0.0
      %477 = vmatpush1.msra.mxu0 %v226
      %478 = vmatprep.subr.mxu0 0.0
      %479 = vmatpush1.msra.mxu0 %v227
      %480 = vmatprep.subr.mxu0 0.0
      %481 = vmatpush1.msra.mxu0 0.0
      %482 = vmatprep.subr.mxu0 0.0
      %483 = vmatpush1.msra.mxu0 0.0
      %484 = vmatprep.subr.mxu0 0.0
      %485 = vmatpush1.msra.mxu0 0.0
      %486 = vmatprep.subr.mxu0 0.0
      %487 = vmatpush1.msra.mxu0 0.0
      %488 = vmatprep.subr.mxu0 0.0
      %489 = vmatpush1.msra.mxu0 0.0
      %490 = vmatprep.subr.mxu0 0.0
      %491 = vmatpush1.msra.mxu0 0.0
      %492 = vmatprep.subr.mxu0 0.0
      %493 = vmatpush1.msra.mxu0 0.0
      %494 = vmatprep.subr.mxu0 0.0
      %495 = vmatpush1.msra.mxu0 0.0
      %496 = vmatprep.subr.mxu0 0.0
      %497 = vmatpush1.msra.mxu0 0.0
      %498 = vmatprep.subr.mxu0 0.0
      %499 = vmatpush1.msra.mxu0 0.0
      %500 = vmatprep.subr.mxu0 0.0
      %501 = vmatpush1.msra.mxu0 0.0
      %502 = vmatprep.subr.mxu0 0.0
      %503 = vmatpush1.msra.mxu0 0.0
      %504 = vmatprep.subr.mxu0 0.0
      %505 = vmatpush1.msra.mxu0 0.0
      %506 = vmatprep.subr.mxu0 0.0
      %507 = vmatpush1.msra.mxu0 0.0
      %508 = vmatprep.subr.mxu0 0.0
      %509 = vmatpush1.msra.mxu0 0.0
      %510 = vmatprep.subr.mxu0 0.0
      %511 = vmatpush1.msra.mxu0 0.0
      %512 = vmatprep.mubr.f32.mxu0 0.0
      %513 = vmatmul.mubr.f32.gmra.mrb[0].mxu0 %v174
      %v514 = vpop.f32.mrb[0].mxu0
      %v515 = vadd.f32 0.0, %v514
      %v516 = vpop.f32.mrb[0].mxu0
      %517 = vdwg.mxu0
      %518 = vmatprep.subr.mxu0 0.0
      %519 = vmatpush1.msra.mxu0 %v228
      %520 = vmatprep.subr.mxu0 0.0
      %521 = vmatpush1.msra.mxu0 %v229
      %522 = vmatprep.subr.mxu0 0.0
      %523 = vmatpush1.msra.mxu0 %v230
      %524 = vmatprep.subr.mxu0 0.0
      %525 = vmatpush1.msra.mxu0 %v231
      %526 = vmatprep.subr.mxu0 0.0
      %527 = vmatpush1.msra.mxu0 %v232
      %528 = vmatprep.subr.mxu0 0.0
      %529 = vmatpush1.msra.mxu0 %v233
      %530 = vmatprep.subr.mxu0 0.0
      %531 = vmatpush1.msra.mxu0 %v234
      %532 = vmatprep.subr.mxu0 0.0
      %533 = vmatpush1.msra.mxu0 %v235
      %534 = vmatprep.subr.mxu0 0.0
      %535 = vmatpush1.msra.mxu0 %v236
      %536 = vmatprep.subr.mxu0 0.0
      %537 = vmatpush1.msra.mxu0 %v237
      %538 = vmatprep.subr.mxu0 0.0
      %539 = vmatpush1.msra.mxu0 %v238
      %540 = vmatprep.subr.mxu0 0.0
      %541 = vmatpush1.msra.mxu0 %v239
      %542 = vmatprep.subr.mxu0 0.0
      %543 = vmatpush1.msra.mxu0 %v240
      %544 = vmatprep.subr.mxu0 0.0
      %545 = vmatpush1.msra.mxu0 %v241
      %546 = vmatprep.subr.mxu0 0.0
      %547 = vmatpush1.msra.mxu0 %v242
      %548 = vmatprep.subr.mxu0 0.0
      %549 = vmatpush1.msra.mxu0 %v243
      %550 = vmatprep.subr.mxu0 0.0
      %551 = vmatpush1.msra.mxu0 0.0
      %552 = vmatprep.subr.mxu0 0.0
      %553 = vmatpush1.msra.mxu0 0.0
      %554 = vmatprep.subr.mxu0 0.0
      %555 = vmatpush1.msra.mxu0 0.0
      %556 = vmatprep.subr.mxu0 0.0
      %557 = vmatpush1.msra.mxu0 0.0
      %558 = vmatprep.subr.mxu0 0.0
      %559 = vmatpush1.msra.mxu0 0.0
      %560 = vmatprep.subr.mxu0 0.0
      %561 = vmatpush1.msra.mxu0 0.0
      %562 = vmatprep.subr.mxu0 0.0
      %563 = vmatpush1.msra.mxu0 0.0
      %564 = vmatprep.subr.mxu0 0.0
      %565 = vmatpush1.msra.mxu0 0.0
      %566 = vmatprep.subr.mxu0 0.0
      %567 = vmatpush1.msra.mxu0 0.0
      %568 = vmatprep.subr.mxu0 0.0
      %569 = vmatpush1.msra.mxu0 0.0
      %570 = vmatprep.subr.mxu0 0.0
      %571 = vmatpush1.msra.mxu0 0.0
      %572 = vmatprep.subr.mxu0 0.0
      %573 = vmatpush1.msra.mxu0 0.0
      %574 = vmatprep.subr.mxu0 0.0
      %575 = vmatpush1.msra.mxu0 0.0
      %576 = vmatprep.subr.mxu0 0.0
      %577 = vmatpush1.msra.mxu0 0.0
      %578 = vmatprep.subr.mxu0 0.0
      %579 = vmatpush1.msra.mxu0 0.0
      %580 = vmatprep.subr.mxu0 0.0
      %581 = vmatpush1.msra.mxu0 0.0
      %582 = vmatprep.mubr.f32.mxu0 0.0
      %583 = vmatmul.mubr.f32.gmra.mrb[0].mxu0 %v175
      %v584 = vpop.f32.mrb[0].mxu0
      %v585 = vadd.f32 0.0, %v584
      %v586 = vpop.f32.mrb[0].mxu0
      %587 = vdwg.mxu0
      %588 = vmatprep.subr.mxu0 0.0
      %589 = vmatpush1.msra.mxu0 %v244
      %590 = vmatprep.subr.mxu0 0.0
      %591 = vmatpush1.msra.mxu0 %v245
      %592 = vmatprep.subr.mxu0 0.0
      %593 = vmatpush1.msra.mxu0 %v246
      %594 = vmatprep.subr.mxu0 0.0
      %595 = vmatpush1.msra.mxu0 %v247
      %596 = vmatprep.subr.mxu0 0.0
      %597 = vmatpush1.msra.mxu0 %v248
      %598 = vmatprep.subr.mxu0 0.0
      %599 = vmatpush1.msra.mxu0 %v249
      %600 = vmatprep.subr.mxu0 0.0
      %601 = vmatpush1.msra.mxu0 %v250
      %602 = vmatprep.subr.mxu0 0.0
      %603 = vmatpush1.msra.mxu0 %v251
      %604 = vmatprep.subr.mxu0 0.0
      %605 = vmatpush1.msra.mxu0 %v252
      %606 = vmatprep.subr.mxu0 0.0
      %607 = vmatpush1.msra.mxu0 %v253
      %608 = vmatprep.subr.mxu0 0.0
      %609 = vmatpush1.msra.mxu0 %v254
      %610 = vmatprep.subr.mxu0 0.0
      %611 = vmatpush1.msra.mxu0 %v255
      %612 = vmatprep.subr.mxu0 0.0
      %613 = vmatpush1.msra.mxu0 %v256
      %614 = vmatprep.subr.mxu0 0.0
      %615 = vmatpush1.msra.mxu0 %v257
      %616 = vmatprep.subr.mxu0 0.0
      %617 = vmatpush1.msra.mxu0 %v258
      %618 = vmatprep.subr.mxu0 0.0
      %619 = vmatpush1.msra.mxu0 %v259
      %620 = vmatprep.subr.mxu0 0.0
      %621 = vmatpush1.msra.mxu0 0.0
      %622 = vmatprep.subr.mxu0 0.0
      %623 = vmatpush1.msra.mxu0 0.0
      %624 = vmatprep.subr.mxu0 0.0
      %625 = vmatpush1.msra.mxu0 0.0
      %626 = vmatprep.subr.mxu0 0.0
      %627 = vmatpush1.msra.mxu0 0.0
      %628 = vmatprep.subr.mxu0 0.0
      %629 = vmatpush1.msra.mxu0 0.0
      %630 = vmatprep.subr.mxu0 0.0
      %631 = vmatpush1.msra.mxu0 0.0
      %632 = vmatprep.subr.mxu0 0.0
      %633 = vmatpush1.msra.mxu0 0.0
      %634 = vmatprep.subr.mxu0 0.0
      %635 = vmatpush1.msra.mxu0 0.0
      %636 = vmatprep.subr.mxu0 0.0
      %637 = vmatpush1.msra.mxu0 0.0
      %638 = vmatprep.subr.mxu0 0.0
      %639 = vmatpush1.msra.mxu0 0.0
      %640 = vmatprep.subr.mxu0 0.0
      %641 = vmatpush1.msra.mxu0 0.0
      %642 = vmatprep.subr.mxu0 0.0
      %643 = vmatpush1.msra.mxu0 0.0
      %644 = vmatprep.subr.mxu0 0.0
      %645 = vmatpush1.msra.mxu0 0.0
      %646 = vmatprep.subr.mxu0 0.0
      %647 = vmatpush1.msra.mxu0 0.0
      %648 = vmatprep.subr.mxu0 0.0
      %649 = vmatpush1.msra.mxu0 0.0
      %650 = vmatprep.subr.mxu0 0.0
      %651 = vmatpush1.msra.mxu0 0.0
      %652 = vmatprep.mubr.f32.mxu0 0.0
      %653 = vmatmul.mubr.f32.gmra.mrb[0].mxu0 %v176
      %v654 = vpop.f32.mrb[0].mxu0
      %v655 = vadd.f32 0.0, %v654
      %v656 = vpop.f32.mrb[0].mxu0
      %657 = vdwg.mxu0
      %658 = vmatprep.subr.mxu0 0.0
      %659 = vmatpush1.msra.mxu0 %v260
      %660 = vmatprep.subr.mxu0 0.0
      %661 = vmatpush1.msra.mxu0 %v261
      %662 = vmatprep.subr.mxu0 0.0
      %663 = vmatpush1.msra.mxu0 %v262
      %664 = vmatprep.subr.mxu0 0.0
      %665 = vmatpush1.msra.mxu0 %v263
      %666 = vmatprep.subr.mxu0 0.0
      %667 = vmatpush1.msra.mxu0 %v264
      %668 = vmatprep.subr.mxu0 0.0
      %669 = vmatpush1.msra.mxu0 %v265
      %670 = vmatprep.subr.mxu0 0.0
      %671 = vmatpush1.msra.mxu0 %v266
      %672 = vmatprep.subr.mxu0 0.0
      %673 = vmatpush1.msra.mxu0 %v267
      %674 = vmatprep.subr.mxu0 0.0
      %675 = vmatpush1.msra.mxu0 %v268
      %676 = vmatprep.subr.mxu0 0.0
      %677 = vmatpush1.msra.mxu0 %v269
      %678 = vmatprep.subr.mxu0 0.0
      %679 = vmatpush1.msra.mxu0 %v270
      %680 = vmatprep.subr.mxu0 0.0
      %681 = vmatpush1.msra.mxu0 %v271
      %682 = vmatprep.subr.mxu0 0.0
      %683 = vmatpush1.msra.mxu0 %v272
      %684 = vmatprep.subr.mxu0 0.0
      %685 = vmatpush1.msra.mxu0 %v273
      %686 = vmatprep.subr.mxu0 0.0
      %687 = vmatpush1.msra.mxu0 %v274
      %688 = vmatprep.subr.mxu0 0.0
      %689 = vmatpush1.msra.mxu0 %v275
      %690 = vmatprep.subr.mxu0 0.0
      %691 = vmatpush1.msra.mxu0 0.0
      %692 = vmatprep.subr.mxu0 0.0
      %693 = vmatpush1.msra.mxu0 0.0
      %694 = vmatprep.subr.mxu0 0.0
      %695 = vmatpush1.msra.mxu0 0.0
      %696 = vmatprep.subr.mxu0 0.0
      %697 = vmatpush1.msra.mxu0 0.0
      %698 = vmatprep.subr.mxu0 0.0
      %699 = vmatpush1.msra.mxu0 0.0
      %700 = vmatprep.subr.mxu0 0.0
      %701 = vmatpush1.msra.mxu0 0.0
      %702 = vmatprep.subr.mxu0 0.0
      %703 = vmatpush1.msra.mxu0 0.0
      %704 = vmatprep.subr.mxu0 0.0
      %705 = vmatpush1.msra.mxu0 0.0
      %706 = vmatprep.subr.mxu0 0.0
      %707 = vmatpush1.msra.mxu0 0.0
      %708 = vmatprep.subr.mxu0 0.0
      %709 = vmatpush1.msra.mxu0 0.0
      %710 = vmatprep.subr.mxu0 0.0
      %711 = vmatpush1.msra.mxu0 0.0
      %712 = vmatprep.subr.mxu0 0.0
      %713 = vmatpush1.msra.mxu0 0.0
      %714 = vmatprep.subr.mxu0 0.0
      %715 = vmatpush1.msra.mxu0 0.0
      %716 = vmatprep.subr.mxu0 0.0
      %717 = vmatpush1.msra.mxu0 0.0
      %718 = vmatprep.subr.mxu0 0.0
      %719 = vmatpush1.msra.mxu0 0.0
      %720 = vmatprep.subr.mxu0 0.0
      %721 = vmatpush1.msra.mxu0 0.0
      %722 = vmatprep.mubr.f32.mxu0 0.0
      %723 = vmatmul.mubr.f32.gmra.mrb[0].mxu0 %v177
      %v724 = vpop.f32.mrb[0].mxu0
      %v725 = vadd.f32 0.0, %v724
      %v726 = vpop.f32.mrb[0].mxu0
      %727 = vdwg.mxu0
      %728 = vmatprep.subr.mxu0 0.0
      %729 = vmatpush1.msra.mxu0 %v276
      %730 = vmatprep.subr.mxu0 0.0
      %731 = vmatpush1.msra.mxu0 %v277
      %732 = vmatprep.subr.mxu0 0.0
      %733 = vmatpush1.msra.mxu0 %v278
      %734 = vmatprep.subr.mxu0 0.0
      %735 = vmatpush1.msra.mxu0 %v279
      %736 = vmatprep.subr.mxu0 0.0
      %737 = vmatpush1.msra.mxu0 %v280
      %738 = vmatprep.subr.mxu0 0.0
      %739 = vmatpush1.msra.mxu0 %v281
      %740 = vmatprep.subr.mxu0 0.0
      %741 = vmatpush1.msra.mxu0 %v282
      %742 = vmatprep.subr.mxu0 0.0
      %743 = vmatpush1.msra.mxu0 %v283
      %744 = vmatprep.subr.mxu0 0.0
      %745 = vmatpush1.msra.mxu0 %v284
      %746 = vmatprep.subr.mxu0 0.0
      %747 = vmatpush1.msra.mxu0 %v285
      %748 = vmatprep.subr.mxu0 0.0
      %749 = vmatpush1.msra.mxu0 %v286
      %750 = vmatprep.subr.mxu0 0.0
      %751 = vmatpush1.msra.mxu0 %v287
      %752 = vmatprep.subr.mxu0 0.0
      %753 = vmatpush1.msra.mxu0 %v288
      %754 = vmatprep.subr.mxu0 0.0
      %755 = vmatpush1.msra.mxu0 %v289
      %756 = vmatprep.subr.mxu0 0.0
      %757 = vmatpush1.msra.mxu0 %v290
      %758 = vmatprep.subr.mxu0 0.0
      %759 = vmatpush1.msra.mxu0 %v291
      %760 = vmatprep.subr.mxu0 0.0
      %761 = vmatpush1.msra.mxu0 0.0
      %762 = vmatprep.subr.mxu0 0.0
      %763 = vmatpush1.msra.mxu0 0.0
      %764 = vmatprep.subr.mxu0 0.0
      %765 = vmatpush1.msra.mxu0 0.0
      %766 = vmatprep.subr.mxu0 0.0
      %767 = vmatpush1.msra.mxu0 0.0
      %768 = vmatprep.subr.mxu0 0.0
      %769 = vmatpush1.msra.mxu0 0.0
      %770 = vmatprep.subr.mxu0 0.0
      %771 = vmatpush1.msra.mxu0 0.0
      %772 = vmatprep.subr.mxu0 0.0
      %773 = vmatpush1.msra.mxu0 0.0
      %774 = vmatprep.subr.mxu0 0.0
      %775 = vmatpush1.msra.mxu0 0.0
      %776 = vmatprep.subr.mxu0 0.0
      %777 = vmatpush1.msra.mxu0 0.0
      %778 = vmatprep.subr.mxu0 0.0
      %779 = vmatpush1.msra.mxu0 0.0
      %780 = vmatprep.subr.mxu0 0.0
      %781 = vmatpush1.msra.mxu0 0.0
      %782 = vmatprep.subr.mxu0 0.0
      %783 = vmatpush1.msra.mxu0 0.0
      %784 = vmatprep.subr.mxu0 0.0
      %785 = vmatpush1.msra.mxu0 0.0
      %786 = vmatprep.subr.mxu0 0.0
      %787 = vmatpush1.msra.mxu0 0.0
      %788 = vmatprep.subr.mxu0 0.0
      %789 = vmatpush1.msra.mxu0 0.0
      %790 = vmatprep.subr.mxu0 0.0
      %791 = vmatpush1.msra.mxu0 0.0
      %792 = vmatprep.mubr.f32.mxu0 0.0
      %793 = vmatmul.mubr.f32.gmra.mrb[0].mxu0 %v178
      %v794 = vpop.f32.mrb[0].mxu0
      %v795 = vadd.f32 0.0, %v794
      %v796 = vpop.f32.mrb[0].mxu0
      %797 = vdwg.mxu0
      %798 = vmatprep.subr.mxu0 0.0
      %799 = vmatpush1.msra.mxu0 %v292
      %800 = vmatprep.subr.mxu0 0.0
      %801 = vmatpush1.msra.mxu0 %v293
      %802 = vmatprep.subr.mxu0 0.0
      %803 = vmatpush1.msra.mxu0 %v294
      %804 = vmatprep.subr.mxu0 0.0
      %805 = vmatpush1.msra.mxu0 %v295
      %806 = vmatprep.subr.mxu0 0.0
      %807 = vmatpush1.msra.mxu0 %v296
      %808 = vmatprep.subr.mxu0 0.0
      %809 = vmatpush1.msra.mxu0 %v297
      %810 = vmatprep.subr.mxu0 0.0
      %811 = vmatpush1.msra.mxu0 %v298
      %812 = vmatprep.subr.mxu0 0.0
      %813 = vmatpush1.msra.mxu0 %v299
      %814 = vmatprep.subr.mxu0 0.0
      %815 = vmatpush1.msra.mxu0 %v300
      %816 = vmatprep.subr.mxu0 0.0
      %817 = vmatpush1.msra.mxu0 %v301
      %818 = vmatprep.subr.mxu0 0.0
      %819 = vmatpush1.msra.mxu0 %v302
      %820 = vmatprep.subr.mxu0 0.0
      %821 = vmatpush1.msra.mxu0 %v303
      %822 = vmatprep.subr.mxu0 0.0
      %823 = vmatpush1.msra.mxu0 %v304
      %824 = vmatprep.subr.mxu0 0.0
      %825 = vmatpush1.msra.mxu0 %v305
      %826 = vmatprep.subr.mxu0 0.0
      %827 = vmatpush1.msra.mxu0 %v306
      %828 = vmatprep.subr.mxu0 0.0
      %829 = vmatpush1.msra.mxu0 %v307
      %830 = vmatprep.subr.mxu0 0.0
      %831 = vmatpush1.msra.mxu0 0.0
      %832 = vmatprep.subr.mxu0 0.0
      %833 = vmatpush1.msra.mxu0 0.0
      %834 = vmatprep.subr.mxu0 0.0
      %835 = vmatpush1.msra.mxu0 0.0
      %836 = vmatprep.subr.mxu0 0.0
      %837 = vmatpush1.msra.mxu0 0.0
      %838 = vmatprep.subr.mxu0 0.0
      %839 = vmatpush1.msra.mxu0 0.0
      %840 = vmatprep.subr.mxu0 0.0
      %841 = vmatpush1.msra.mxu0 0.0
      %842 = vmatprep.subr.mxu0 0.0
      %843 = vmatpush1.msra.mxu0 0.0
      %844 = vmatprep.subr.mxu0 0.0
      %845 = vmatpush1.msra.mxu0 0.0
      %846 = vmatprep.subr.mxu0 0.0
      %847 = vmatpush1.msra.mxu0 0.0
      %848 = vmatprep.subr.mxu0 0.0
      %849 = vmatpush1.msra.mxu0 0.0
      %850 = vmatprep.subr.mxu0 0.0
      %851 = vmatpush1.msra.mxu0 0.0
      %852 = vmatprep.subr.mxu0 0.0
      %853 = vmatpush1.msra.mxu0 0.0
      %854 = vmatprep.subr.mxu0 0.0
      %855 = vmatpush1.msra.mxu0 0.0
      %856 = vmatprep.subr.mxu0 0.0
      %857 = vmatpush1.msra.mxu0 0.0
      %858 = vmatprep.subr.mxu0 0.0
      %859 = vmatpush1.msra.mxu0 0.0
      %860 = vmatprep.subr.mxu0 0.0
      %861 = vmatpush1.msra.mxu0 0.0
      %862 = vmatprep.mubr.f32.mxu0 0.0
      %863 = vmatmul.mubr.f32.gmra.mrb[0].mxu0 %v179
      %v864 = vpop.f32.mrb[0].mxu0
      %v865 = vadd.f32 0.0, %v864
      %v866 = vpop.f32.mrb[0].mxu0
      %867 = vdwg.mxu0
      %868 = vst [vmem:[%s170] sm:$0xff] %v375
      %869 = vst [vmem:[%s170 + $0x8] sm:$0xff] %v445
      %870 = vst [vmem:[%s170 + $0x10] sm:$0xff] %v515
      %871 = vst [vmem:[%s170 + $0x18] sm:$0xff] %v585
      %872 = vst [vmem:[%s170 + $0x20] sm:$0xff] %v655
      %873 = vst [vmem:[%s170 + $0x28] sm:$0xff] %v725
      %874 = vst [vmem:[%s170 + $0x30] sm:$0xff] %v795
      %875 = vst [vmem:[%s170 + $0x38] sm:$0xff] %v865
      %s876 = smul.u32 8, %s13
      %p877 = scmp.lt.s32.totalorder %s876, 71
      %s878 = scalar_select %p877, %s876, 71
      %s879 = smul.addr %s878, 8
      %s880 = scalar_lea.vmem %s2, %s879
      // Predicated region
      $region29: #{_lambda_.1} parent=27 // pred_check
        %p881 = pneg %p83
      $region30: #{_lambda_.1} parent=27 // pred_check_branch
        %883 = sbr.rel (%p881) target = $region32
      $region31: #{_lambda_.1} parent=27 // pred_region
        %s884 = smul.u32 8, %s13
      $region32: #{_lambda_.1} parent=27 // pred_fallthru
        _
    $region28: #{_lambda_.1} parent=5 // pred_fallthru
      _
    %p885 = scmp.le.s32.totalorder 2, %s8
    // Predicated region
    $region33: #{_lambda_.1} parent=5 // pred_check
      %p886 = pneg %p885
    $region34: #{_lambda_.1} parent=5 // pred_check_branch
      %888 = sbr.rel (%p886) target = $region36
    $region35: #{_lambda_.1} parent=5 // pred_region
      %s889 = ssub.s32 %s8, 2
      // Predicated region
      $region37: #{_lambda_.1} parent=35 // pred_check
        %p890 = pneg %p89
      $region38: #{_lambda_.1} parent=35 // pred_check_branch
        %892 = sbr.rel (%p890) target = $region40
      $region39: #{_lambda_.1} parent=35 // pred_region
        %s893 = smul.u32 8, %s14
        %p894 = scmp.lt.s32.totalorder %s893, 71
        %s895 = scalar_select %p894, %s893, 71
        %s896 = smul.addr %s895, 8
        %s897 = scalar_lea.vmem %s2, %s896
      $region40: #{_lambda_.1} parent=35 // pred_fallthru
        _
    $region36: #{_lambda_.1} parent=5 // pred_fallthru
      _
  $region6: #{_lambda_.1} parent=0 // loop_footer
    %s12 = sadd.s32 1, %s8
  $region7: #{_lambda_.1} parent=0 // loop_footer_branch
    %7 = sbr.rel target = $region3
  $region8: #{_lambda_.1} parent=0 // loop_exit
    _

// kernel: reverse.0
$region0: #{reverse.0}
  %s0 = inlined_call_operand.vmem [shape: f32[2,4,16,7], index: 0, kind: input, shape index: {}]
  %s1 = inlined_call_operand.vmem [shape: f32[2,4,16,7], index: 1, kind: output, shape index: {}]
  $region1: #{reverse.0} parent=0
    #allocation0 [shape = 'u8[65536]{0}', space=vmem, size = 0x10000, scoped, tag = 'operand span for operand 0']
    #allocation1 [shape = 'u8[32768]{0}', space=vmem, size = 0x8000, scoped, tag = 'operand span for operand 1']
    %s2 = scalar_lea.vmem [#allocation0], 8
    // Predicated region
    $region2: #{reverse.0} parent=1 // pred_check
      _
    $region3: #{reverse.0} parent=1 // pred_check_branch
      %4 = sbr.rel (0) target = $region5
    $region4: #{reverse.0} parent=1 // pred_region
      // Predicated region
      $region6: #{reverse.0} parent=4 // pred_check
        _
      $region7: #{reverse.0} parent=4 // pred_check_branch
        %6 = sbr.rel (0) target = $region9
      $region8: #{reverse.0} parent=4 // pred_region
        // Predicated region
        $region21: #{reverse.0} parent=8 // pred_check
          _
        $region22: #{reverse.0} parent=8 // pred_check_branch
          %35 = sbr.rel (0) target = $region24
        $region23: #{reverse.0} parent=8 // pred_region
          loop: start=0, step=1, limit=1
          $region25: #{reverse.0} parent=23 // loop_pre_header
            _
          $region26: #{reverse.0} parent=23 // loop_header
            %s37 = sphi 0, %s41
            %p38 = scmp.ge.s32.totalorder %s37, 1
            %s42 = sphi %s0, %s0
            %s43 = sphi %s2, %s2
          $region27: #{reverse.0} parent=23 // loop_header_branch
            %40 = sbr.rel (%p38) target = $region31
          $region28: #{reverse.0} parent=23 // loop_body
            %v44 = vld [vmem:[%s42] sm:$0xff]
            %45 = vst [vmem:[%s43] sm:$0xff] %v44
            %v46 = vld [vmem:[%s42 + $0x8] sm:$0xff]
            %47 = vst [vmem:[%s43 + $0x10] sm:$0xff] %v46
            %v48 = vld [vmem:[%s42 + $0x10] sm:$0xff]
            %49 = vst [vmem:[%s43 + $0x20] sm:$0xff] %v48
            %v50 = vld [vmem:[%s42 + $0x18] sm:$0xff]
            %51 = vst [vmem:[%s43 + $0x30] sm:$0xff] %v50
            %v52 = vld [vmem:[%s42 + $0x20] sm:$0xff]
            %53 = vst [vmem:[%s43 + $0x40] sm:$0xff] %v52
            %v54 = vld [vmem:[%s42 + $0x28] sm:$0xff]
            %55 = vst [vmem:[%s43 + $0x50] sm:$0xff] %v54
            %v56 = vld [vmem:[%s42 + $0x30] sm:$0xff]
            %57 = vst [vmem:[%s43 + $0x60] sm:$0xff] %v56
            %v58 = vld [vmem:[%s42 + $0x38] sm:$0xff]
            %59 = vst [vmem:[%s43 + $0x70] sm:$0xff] %v58
          $region29: #{reverse.0} parent=23 // loop_footer
            %s41 = sadd.s32 1, %s37
          $region30: #{reverse.0} parent=23 // loop_footer_branch
            %36 = sbr.rel target = $region26
          $region31: #{reverse.0} parent=23 // loop_exit
            _
        $region24: #{reverse.0} parent=8 // pred_fallthru
          _
        // Predicated region
        $region32: #{reverse.0} parent=8 // pred_check
          _
        $region33: #{reverse.0} parent=8 // pred_check_branch
          %61 = sbr.rel target = $region35
        $region34: #{reverse.0} parent=8 // pred_region
          _
        $region35: #{reverse.0} parent=8 // pred_fallthru
          _
      $region9: #{reverse.0} parent=4 // pred_fallthru
        _
      // Predicated region
      $region10: #{reverse.0} parent=4 // pred_check
        _
      $region11: #{reverse.0} parent=4 // pred_check_branch
        %8 = sbr.rel target = $region13
      $region12: #{reverse.0} parent=4 // pred_region
        loop: start=0, step=1, limit=1
        $region14: #{reverse.0} parent=12 // loop_pre_header
          _
        $region15: #{reverse.0} parent=12 // loop_header
          %s11 = sphi 0, %s15
          %p12 = scmp.ge.s32.totalorder %s11, 1
          %s16 = sphi %s0, %s0
          %s17 = sphi %s2, %s2
        $region16: #{reverse.0} parent=12 // loop_header_branch
          %14 = sbr.rel (%p12) target = $region20
        $region17: #{reverse.0} parent=12 // loop_body
          %v18 = vld [vmem:[%s16] sm:$0xff]
          %19 = vst [vmem:[%s17] sm:$0xff] %v18
          %v20 = vld [vmem:[%s16 + $0x8] sm:$0xff]
          %21 = vst [vmem:[%s17 + $0x10] sm:$0xff] %v20
          %v22 = vld [vmem:[%s16 + $0x10] sm:$0xff]
          %23 = vst [vmem:[%s17 + $0x20] sm:$0xff] %v22
          %v24 = vld [vmem:[%s16 + $0x18] sm:$0xff]
          %25 = vst [vmem:[%s17 + $0x30] sm:$0xff] %v24
          %v26 = vld [vmem:[%s16 + $0x20] sm:$0xff]
          %27 = vst [vmem:[%s17 + $0x40] sm:$0xff] %v26
          %v28 = vld [vmem:[%s16 + $0x28] sm:$0xff]
          %29 = vst [vmem:[%s17 + $0x50] sm:$0xff] %v28
          %v30 = vld [vmem:[%s16 + $0x30] sm:$0xff]
          %31 = vst [vmem:[%s17 + $0x60] sm:$0xff] %v30
          %v32 = vld [vmem:[%s16 + $0x38] sm:$0xff]
          %33 = vst [vmem:[%s17 + $0x70] sm:$0xff] %v32
        $region18: #{reverse.0} parent=12 // loop_footer
          %s15 = sadd.s32 1, %s11
        $region19: #{reverse.0} parent=12 // loop_footer_branch
          %10 = sbr.rel target = $region15
        $region20: #{reverse.0} parent=12 // loop_exit
          _
      $region13: #{reverse.0} parent=4 // pred_fallthru
        _
    $region5: #{reverse.0} parent=1 // pred_fallthru
      _
    %62 = vnop
    %s63 = scalar_lea.vmem [#allocation0], 7
    %v64 = vld [vmem:[%s63] ss:$-1 sm:$0xff]
    %v65 = vrot.slane %v64, 1
    %66 = vst [vmem:[#allocation1] sm:$0xff] %v65
    %s67 = scalar_lea.vmem [#allocation0], 8
    %s68 = scalar_lea.vmem %s67, 7 [#allocation0]
    %v69 = vld [vmem:[%s68] ss:$-1 sm:$0xff]
    %v70 = vrot.slane %v69, 1
    %v71 = vlaneseq
    %v72 = vshrl.u32 %v71, 7
    %vm73 = vcmp.lt.s32.totalorder %v72, 7
    %74 = vst.msk [vmem:[#allocation1] sm:$0xff] %vm73, %v70
    %s75 = scalar_lea.vmem [#allocation1], 8
    %s76 = scalar_lea.vmem [#allocation0], 16
    %s77 = scalar_lea.vmem %s76, 7 [#allocation0]
    %v78 = vld [vmem:[%s77] ss:$-1 sm:$0xff]
    %v79 = vrot.slane %v78, 1
    %80 = vst [vmem:[%s75] sm:$0xff] %v79
    %s81 = scalar_lea.vmem %s76, 8 [#allocation0]
    %s82 = scalar_lea.vmem %s81, 7 [#allocation0]
    %v83 = vld [vmem:[%s82] ss:$-1 sm:$0xff]
    %v84 = vrot.slane %v83, 1
    %v85 = vlaneseq
    %v86 = vshrl.u32 %v85, 7
    %vm87 = vcmp.lt.s32.totalorder %v86, 7
    %88 = vst.msk [vmem:[%s75] sm:$0xff] %vm87, %v84
    %s89 = scalar_lea.vmem [#allocation1], 16
    %s90 = scalar_lea.vmem [#allocation0], 32
    %s91 = scalar_lea.vmem %s90, 7 [#allocation0]
    %v92 = vld [vmem:[%s91] ss:$-1 sm:$0xff]
    %v93 = vrot.slane %v92, 1
    %94 = vst [vmem:[%s89] sm:$0xff] %v93
    %s95 = scalar_lea.vmem %s90, 8 [#allocation0]
    %s96 = scalar_lea.vmem %s95, 7 [#allocation0]
    %v97 = vld [vmem:[%s96] ss:$-1 sm:$0xff]
    %v98 = vrot.slane %v97, 1
    %v99 = vlaneseq
    %v100 = vshrl.u32 %v99, 7
    %vm101 = vcmp.lt.s32.totalorder %v100, 7
    %102 = vst.msk [vmem:[%s89] sm:$0xff] %vm101, %v98
    %s103 = scalar_lea.vmem [#allocation1], 24
    %s104 = scalar_lea.vmem [#allocation0], 48
    %s105 = scalar_lea.vmem %s104, 7 [#allocation0]
    %v106 = vld [vmem:[%s105] ss:$-1 sm:$0xff]
    %v107 = vrot.slane %v106, 1
    %108 = vst [vmem:[%s103] sm:$0xff] %v107
    %s109 = scalar_lea.vmem %s104, 8 [#allocation0]
    %s110 = scalar_lea.vmem %s109, 7 [#allocation0]
    %v111 = vld [vmem:[%s110] ss:$-1 sm:$0xff]
    %v112 = vrot.slane %v111, 1
    %v113 = vlaneseq
    %v114 = vshrl.u32 %v113, 7
    %vm115 = vcmp.lt.s32.totalorder %v114, 7
    %116 = vst.msk [vmem:[%s103] sm:$0xff] %vm115, %v112
    %s117 = scalar_lea.vmem [#allocation1], 32
    %s118 = scalar_lea.vmem [#allocation0], 64
    %s119 = scalar_lea.vmem %s118, 7 [#allocation0]
    %v120 = vld [vmem:[%s119] ss:$-1 sm:$0xff]
    %v121 = vrot.slane %v120, 1
    %122 = vst [vmem:[%s117] sm:$0xff] %v121
    %s123 = scalar_lea.vmem %s118, 8 [#allocation0]
    %s124 = scalar_lea.vmem %s123, 7 [#allocation0]
    %v125 = vld [vmem:[%s124] ss:$-1 sm:$0xff]
    %v126 = vrot.slane %v125, 1
    %v127 = vlaneseq
    %v128 = vshrl.u32 %v127, 7
    %vm129 = vcmp.lt.s32.totalorder %v128, 7
    %130 = vst.msk [vmem:[%s117] sm:$0xff] %vm129, %v126
    %s131 = scalar_lea.vmem [#allocation1], 40
    %s132 = scalar_lea.vmem [#allocation0], 80
    %s133 = scalar_lea.vmem %s132, 7 [#allocation0]
    %v134 = vld [vmem:[%s133] ss:$-1 sm:$0xff]
    %v135 = vrot.slane %v134, 1
    %136 = vst [vmem:[%s131] sm:$0xff] %v135
    %s137 = scalar_lea.vmem %s132, 8 [#allocation0]
    %s138 = scalar_lea.vmem %s137, 7 [#allocation0]
    %v139 = vld [vmem:[%s138] ss:$-1 sm:$0xff]
    %v140 = vrot.slane %v139, 1
    %v141 = vlaneseq
    %v142 = vshrl.u32 %v141, 7
    %vm143 = vcmp.lt.s32.totalorder %v142, 7
    %144 = vst.msk [vmem:[%s131] sm:$0xff] %vm143, %v140
    %s145 = scalar_lea.vmem [#allocation1], 48
    %s146 = scalar_lea.vmem [#allocation0], 96
    %s147 = scalar_lea.vmem %s146, 7 [#allocation0]
    %v148 = vld [vmem:[%s147] ss:$-1 sm:$0xff]
    %v149 = vrot.slane %v148, 1
    %150 = vst [vmem:[%s145] sm:$0xff] %v149
    %s151 = scalar_lea.vmem %s146, 8 [#allocation0]
    %s152 = scalar_lea.vmem %s151, 7 [#allocation0]
    %v153 = vld [vmem:[%s152] ss:$-1 sm:$0xff]
    %v154 = vrot.slane %v153, 1
    %v155 = vlaneseq
    %v156 = vshrl.u32 %v155, 7
    %vm157 = vcmp.lt.s32.totalorder %v156, 7
    %158 = vst.msk [vmem:[%s145] sm:$0xff] %vm157, %v154
    %s159 = scalar_lea.vmem [#allocation1], 56
    %s160 = scalar_lea.vmem [#allocation0], 112
    %s161 = scalar_lea.vmem %s160, 7 [#allocation0]
    %v162 = vld [vmem:[%s161] ss:$-1 sm:$0xff]
    %v163 = vrot.slane %v162, 1
    %164 = vst [vmem:[%s159] sm:$0xff] %v163
    %s165 = scalar_lea.vmem %s160, 8 [#allocation0]
    %s166 = scalar_lea.vmem %s165, 7 [#allocation0]
    %v167 = vld [vmem:[%s166] ss:$-1 sm:$0xff]
    %v168 = vrot.slane %v167, 1
    %v169 = vlaneseq
    %v170 = vshrl.u32 %v169, 7
    %vm171 = vcmp.lt.s32.totalorder %v170, 7
    %172 = vst.msk [vmem:[%s159] sm:$0xff] %vm171, %v168
    // Predicated region
    $region36: #{reverse.0} parent=1 // pred_check
      _
    $region37: #{reverse.0} parent=1 // pred_check_branch
      %174 = sbr.rel (0) target = $region39
    $region38: #{reverse.0} parent=1 // pred_region
      // Predicated region
      $region40: #{reverse.0} parent=38 // pred_check
        _
      $region41: #{reverse.0} parent=38 // pred_check_branch
        %176 = sbr.rel (0) target = $region43
      $region42: #{reverse.0} parent=38 // pred_region
        // Predicated region
        $region55: #{reverse.0} parent=42 // pred_check
          _
        $region56: #{reverse.0} parent=42 // pred_check_branch
          %205 = sbr.rel (0) target = $region58
        $region57: #{reverse.0} parent=42 // pred_region
          loop: start=0, step=1, limit=1
          $region59: #{reverse.0} parent=57 // loop_pre_header
            _
          $region60: #{reverse.0} parent=57 // loop_header
            %s207 = sphi 0, %s211
            %p208 = scmp.ge.s32.totalorder %s207, 1
            %s212 = sphi [#allocation1], [#allocation1]
            %s213 = sphi %s1, %s1
          $region61: #{reverse.0} parent=57 // loop_header_branch
            %210 = sbr.rel (%p208) target = $region65
          $region62: #{reverse.0} parent=57 // loop_body
            %v214 = vld [vmem:[%s212] sm:$0xff]
            %215 = vst [vmem:[%s213] sm:$0xff] %v214
            %v216 = vld [vmem:[%s212 + $0x8] sm:$0xff]
            %217 = vst [vmem:[%s213 + $0x8] sm:$0xff] %v216
            %v218 = vld [vmem:[%s212 + $0x10] sm:$0xff]
            %219 = vst [vmem:[%s213 + $0x10] sm:$0xff] %v218
            %v220 = vld [vmem:[%s212 + $0x18] sm:$0xff]
            %221 = vst [vmem:[%s213 + $0x18] sm:$0xff] %v220
            %v222 = vld [vmem:[%s212 + $0x20] sm:$0xff]
            %223 = vst [vmem:[%s213 + $0x20] sm:$0xff] %v222
            %v224 = vld [vmem:[%s212 + $0x28] sm:$0xff]
            %225 = vst [vmem:[%s213 + $0x28] sm:$0xff] %v224
            %v226 = vld [vmem:[%s212 + $0x30] sm:$0xff]
            %227 = vst [vmem:[%s213 + $0x30] sm:$0xff] %v226
            %v228 = vld [vmem:[%s212 + $0x38] sm:$0xff]
            %229 = vst [vmem:[%s213 + $0x38] sm:$0xff] %v228
          $region63: #{reverse.0} parent=57 // loop_footer
            %s211 = sadd.s32 1, %s207
          $region64: #{reverse.0} parent=57 // loop_footer_branch
            %206 = sbr.rel target = $region60
          $region65: #{reverse.0} parent=57 // loop_exit
            _
        $region58: #{reverse.0} parent=42 // pred_fallthru
          _
        // Predicated region
        $region66: #{reverse.0} parent=42 // pred_check
          _
        $region67: #{reverse.0} parent=42 // pred_check_branch
          %231 = sbr.rel target = $region69
        $region68: #{reverse.0} parent=42 // pred_region
          _
        $region69: #{reverse.0} parent=42 // pred_fallthru
          _
      $region43: #{reverse.0} parent=38 // pred_fallthru
        _
      // Predicated region
      $region44: #{reverse.0} parent=38 // pred_check
        _
      $region45: #{reverse.0} parent=38 // pred_check_branch
        %178 = sbr.rel target = $region47
      $region46: #{reverse.0} parent=38 // pred_region
        loop: start=0, step=1, limit=1
        $region48: #{reverse.0} parent=46 // loop_pre_header
          _
        $region49: #{reverse.0} parent=46 // loop_header
          %s181 = sphi 0, %s185
          %p182 = scmp.ge.s32.totalorder %s181, 1
          %s186 = sphi [#allocation1], [#allocation1]
          %s187 = sphi %s1, %s1
        $region50: #{reverse.0} parent=46 // loop_header_branch
          %184 = sbr.rel (%p182) target = $region54
        $region51: #{reverse.0} parent=46 // loop_body
          %v188 = vld [vmem:[%s186] sm:$0xff]
          %189 = vst [vmem:[%s187] sm:$0xff] %v188
          %v190 = vld [vmem:[%s186 + $0x8] sm:$0xff]
          %191 = vst [vmem:[%s187 + $0x8] sm:$0xff] %v190
          %v192 = vld [vmem:[%s186 + $0x10] sm:$0xff]
          %193 = vst [vmem:[%s187 + $0x10] sm:$0xff] %v192
          %v194 = vld [vmem:[%s186 + $0x18] sm:$0xff]
          %195 = vst [vmem:[%s187 + $0x18] sm:$0xff] %v194
          %v196 = vld [vmem:[%s186 + $0x20] sm:$0xff]
          %197 = vst [vmem:[%s187 + $0x20] sm:$0xff] %v196
          %v198 = vld [vmem:[%s186 + $0x28] sm:$0xff]
          %199 = vst [vmem:[%s187 + $0x28] sm:$0xff] %v198
          %v200 = vld [vmem:[%s186 + $0x30] sm:$0xff]
          %201 = vst [vmem:[%s187 + $0x30] sm:$0xff] %v200
          %v202 = vld [vmem:[%s186 + $0x38] sm:$0xff]
          %203 = vst [vmem:[%s187 + $0x38] sm:$0xff] %v202
        $region52: #{reverse.0} parent=46 // loop_footer
          %s185 = sadd.s32 1, %s181
        $region53: #{reverse.0} parent=46 // loop_footer_branch
          %180 = sbr.rel target = $region49
        $region54: #{reverse.0} parent=46 // loop_exit
          _
      $region47: #{reverse.0} parent=38 // pred_fallthru
        _
    $region39: #{reverse.0} parent=1 // pred_fallthru
      _
    %232 = vnop

</llo_original>
